<compile_context>
chip_gen: v7x
topology: tpu7x:2x2x1
jax: 0.10.0
libtpu: 0.0.40
codegen_flags: <defaults>
</compile_context>

<pallas_src>
import jax
import jax.numpy as jnp
from jax.experimental import pallas as pl
from jax.experimental.pallas import tpu as pltpu


# ---------------------------------------------------------------------------
# Kernel 1: hoisted SharedMLP base  z_base = X @ W + b   (computed once)
# ---------------------------------------------------------------------------
def _zbase_kernel(x_ref, w_ref, b_ref, o_ref):
    o_ref[...] = (jnp.dot(x_ref[...], w_ref[...],
                          preferred_element_type=jnp.float32) + b_ref[...])


# ---------------------------------------------------------------------------
# Kernel 2: per pillar tile — scatter-mean, centered correction, ReLU,
#           packed scatter-max; two-phase pass over point chunks.
# ---------------------------------------------------------------------------
def _projection_kernel(idx_ref, norm1_ref, zb_ref, wxc_ref, gid_ref,
                       out_ref, sc_ref, corr_ref, max_ref):
    ph = pl.program_id(1)                        # 0: accumulate sums, 1: max
    c = pl.program_id(2)                         # point chunk
    nchunks = pl.num_programs(2)
    NC = idx_ref.shape[0]                        # points in this chunk
    n_groups, lane_w = out_ref.shape             # (TP//8, 8*Cout)
    TP = n_groups * 8                            # pillars handled by this tile
    p_start = pl.program_id(0) * TP

    local = idx_ref[...] - p_start               # [NC, 1] local pillar id
    lane_p = jax.lax.broadcasted_iota(jnp.int32, (NC, TP), 1)
    onehot = (lane_p == local).astype(jnp.float32)          # [NC, TP] lane-dense

    # ---- phase 0: per-pillar sums + counts (fused via the ones column) -----
    @pl.when(ph == 0)
    def _phase0():
        @pl.when(c == 0)
        def _():
            sc_ref[...] = jnp.zeros_like(sc_ref)
        sc_ref[...] += jax.lax.dot_general(
            onehot, norm1_ref[...], (((0,), (0,)), ((), ())),
            preferred_element_type=jnp.float32)             # [TP, 4]

    # ---- phase 1: correction, ReLU, running packed scatter-max -------------
    @pl.when(ph == 1)
    def _phase1():
        @pl.when(c == 0)
        def _():
            sc = sc_ref[...]
            counts = jnp.maximum(sc[:, 3:4], 1.0)           # f32 counts: exact < 2^24
            mean = sc[:, 0:3] / counts                      # [TP, 3]
            corr_ref[...] = jnp.dot(mean, wxc_ref[...],
                                    preferred_element_type=jnp.float32)   # [TP, Cout]
            max_ref[...] = jnp.zeros_like(max_ref)

        # z = relu(z_base - mean[index] @ wxc); the gather of the correction
        # goes through the MXU (onehot @ corr). Points outside this pillar
        # tile / padding points have an all-zero onehot row (wrong z) but are
        # masked out of the scatter-max below, so the tile result is exact.
        z = zb_ref[...] - jnp.dot(onehot, corr_ref[...],
                                  preferred_element_type=jnp.float32)     # [NC, Cout]
        z = jnp.maximum(z, 0.0)                              # ReLU => z >= 0

        # scatter-max: 8 pillars packed per lane-dense output row. Zero-fill
        # is valid ONLY because z >= 0 (matches torch zero-init scatter-max).
        z_rep = jnp.tile(z, (1, 8))                          # [NC, 8*Cout]
        gid = gid_ref[...]                                   # [1, 8*Cout]: lane -> 0..7
        rows = []
        for g in range(n_groups):                            # static unroll
            mask = (local == gid + g * 8)                    # [NC, 8*Cout]
            rows.append(jnp.max(jnp.where(mask, z_rep, 0.0),
                                axis=0, keepdims=True))
        max_ref[...] = jnp.maximum(max_ref[...],
                                   jnp.concatenate(rows, axis=0))

        @pl.when(c == nchunks - 1)
        def _():
            out_ref[...] = max_ref[...]                      # one coalesced store


def init_params(key, in_channels, out_channels, bn_eps=1e-5):
    """Deterministic SharedMLP params with BatchNorm folded in.

    Returns (wf [C, Cout], wx [5, Cout], b [1, Cout]); wx rows 0-1 are the
    x_p/y_p weights, rows 2-4 the centered-coordinate weights (matches the
    torch cat(features, x_p_y_p, x_c_y_c_z_c) channel order).
    """
    k1, k2 = jax.random.split(key)
    cin = in_channels + 5
    w = jax.random.normal(k1, (cin, out_channels), jnp.float32) * 0.1
    b = jax.random.normal(k2, (out_channels,), jnp.float32) * 0.1
    gamma = jnp.ones((out_channels,), jnp.float32)
    beta = jnp.zeros((out_channels,), jnp.float32)
    r_mean = jnp.zeros((out_channels,), jnp.float32)
    r_var = jnp.ones((out_channels,), jnp.float32)
    scale = gamma / jnp.sqrt(r_var + bn_eps)
    w_eff = w * scale[None, :]
    b_eff = (b - r_mean) * scale + beta
    wf = w_eff[:in_channels]
    wx = w_eff[in_channels:]
    return wf, wx, b_eff.reshape(1, out_channels)


def projection_forward(features, norm_coords, coords_int, p_v_dist, proj_axis,
                       params, resolution, *, tile_p=128, point_chunk=512,
                       matmul_dtype=jnp.float32):
    """Pallas implementation of Projection.forward.

    tile_p:       pillars per grid tile (128 => lane-dense one-hot).
    point_chunk:  points per inner chunk (bounds per-step VMEM / live vregs).
    matmul_dtype: set jnp.bfloat16 on v6e/v7x to run the SharedMLP matmul at
                  native MXU rate (counts/means path always stays f32).
    """
    B, C, Np = features.shape
    R = int(resolution)
    N = B * Np
    axes_all = [0, 1, 2, 3]
    axes = axes_all[:proj_axis] + axes_all[proj_axis + 1:]

    xpyp = p_v_dist[:, jnp.array(axes[1:])]                        # [N, 2]
    ci = coords_int[:, jnp.array(axes)].astype(jnp.int32)          # [N, 3]
    index = ci[:, 0] * R * R + ci[:, 1] * R + ci[:, 2]             # [N]
    points = jnp.transpose(features, (0, 2, 1)).reshape(N, C)      # [N, C]

    wf, wx, b_eff = params
    cout = wf.shape[1]
    P = B * R * R

    # ---- pillar tiling ------------------------------------------------------
    assert tile_p % 8 == 0
    TP = int(tile_p)
    P_pad = ((P + TP - 1) // TP) * TP
    ntiles = P_pad // TP
    lane_w = 8 * cout

    # ---- point chunking (bounds VMEM independent of N) ----------------------
    NC = min(int(point_chunk), ((N + 7) // 8) * 8)
    NC = max(8, (NC // 8) * 8)
    N_pad = ((N + NC - 1) // NC) * NC
    nchunks = N_pad // NC
    pad = N_pad - N

    # Lane-packed point matrix for the hoisted matmul: X = [feat | xp,yp | norm]
    X = jnp.concatenate([points, xpyp, norm_coords], axis=1)       # [N, C+5]
    norm1 = jnp.concatenate(
        [norm_coords, jnp.ones((N, 1), norm_coords.dtype)], axis=1)  # [N, 4]
    if pad:
        X = jnp.concatenate([X, jnp.zeros((pad, C + 5), X.dtype)], axis=0)
        norm1 = jnp.concatenate([norm1, jnp.zeros((pad, 4), norm1.dtype)], axis=0)
        index = jnp.concatenate(
            [index, jnp.full((pad,), P_pad, jnp.int32)], axis=0)   # never matches a tile

    W = jnp.concatenate([wf, wx], axis=0)                          # [C+5, Cout]
    wxc = wx[2:5]                                                  # centered-coord weights

    # ---- kernel 1: z_base = X @ W + b (once, NOT per pillar tile) -----------
    z_base = pl.pallas_call(
        _zbase_kernel,
        out_shape=jax.ShapeDtypeStruct((N_pad, cout), jnp.float32),
        grid=(nchunks,),
        in_specs=[
            pl.BlockSpec((NC, C + 5), lambda c: (c, 0)),
            pl.BlockSpec((C + 5, cout), lambda c: (0, 0)),
            pl.BlockSpec((1, cout), lambda c: (0, 0)),
        ],
        out_specs=pl.BlockSpec((NC, cout), lambda c: (c, 0)),
        compiler_params=pltpu.CompilerParams(
            dimension_semantics=("parallel",)),
    )(X.astype(matmul_dtype), W.astype(matmul_dtype), b_eff)

    # lane -> group-local pillar id (0..7), precomputed host-side.
    gid = (jnp.arange(lane_w, dtype=jnp.int32) // cout).reshape(1, lane_w)

    # ---- kernel 2: pillar means + centered correction + packed scatter-max --
    out_packed = pl.pallas_call(
        _projection_kernel,
        out_shape=jax.ShapeDtypeStruct((P_pad // 8, lane_w), jnp.float32),
        grid=(ntiles, 2, nchunks),
        in_specs=[
            pl.BlockSpec((NC, 1), lambda i, ph, c: (c, 0)),        # pillar index
            pl.BlockSpec((NC, 4), lambda i, ph, c: (c, 0)),        # norm | ones
            pl.BlockSpec((NC, cout), lambda i, ph, c: (c, 0)),     # z_base chunk
            pl.BlockSpec((3, cout), lambda i, ph, c: (0, 0)),      # wxc
            pl.BlockSpec((1, lane_w), lambda i, ph, c: (0, 0)),    # lane group ids
        ],
        out_specs=pl.BlockSpec((TP // 8, lane_w), lambda i, ph, c: (i, 0)),
        scratch_shapes=[
            pltpu.VMEM((TP, 4), jnp.float32),          # sums + counts
            pltpu.VMEM((TP, cout), jnp.float32),       # mean @ wxc
            pltpu.VMEM((TP // 8, lane_w), jnp.float32) # running packed max
        ],
        compiler_params=pltpu.CompilerParams(
            dimension_semantics=("parallel", "arbitrary", "arbitrary"),
            vmem_limit_bytes=32 * 1024 * 1024,          # safe on v5e/v6e/v7x
        ),
    )(index.reshape(N_pad, 1), norm1, z_base, wxc, gid)

    out = out_packed.reshape(P_pad, cout)[:P]
    return out.reshape(B, R, R, cout)


def reference(features, norm_coords, coords_int, p_v_dist, proj_axis, params, R):
    """Pure-JAX reference mirroring the PyTorch forward."""
    B, C, Np = features.shape
    N = B * Np
    axes_all = [0, 1, 2, 3]
    axes = axes_all[:proj_axis] + axes_all[proj_axis + 1:]
    xpyp = p_v_dist[:, jnp.array(axes[1:])]
    ci = coords_int[:, jnp.array(axes)].astype(jnp.int32)
    index = ci[:, 0] * R * R + ci[:, 1] * R + ci[:, 2]
    P = B * R * R
    sums = jax.ops.segment_sum(norm_coords, index, num_segments=P)
    counts = jax.ops.segment_sum(jnp.ones((N,), jnp.float32), index, num_segments=P)
    mean = sums / jnp.maximum(counts, 1.0)[:, None]
    centered = norm_coords - mean[index]
    points = jnp.transpose(features, (0, 2, 1)).reshape(N, C)
    wf, wx, b = params
    z = jnp.maximum(points @ wf + xpyp @ wx[:2] + centered @ wx[2:] + b, 0.0)
    cout = wf.shape[1]
    pf = jnp.zeros((P, cout), jnp.float32).at[index].max(z)
    return pf.reshape(B, R, R, cout)


if __name__ == "__main__":
    key = jax.random.PRNGKey(0)
    B, C, Np, R, Cout = 2, 4, 16, 8, 16
    proj_axis = 1
    N = B * Np

    ks = jax.random.split(key, 5)
    features = jax.random.normal(ks[0], (B, C, Np), jnp.float32)
    norm_coords = jax.random.normal(ks[1], (N, 3), jnp.float32)
    batch_idx = jnp.repeat(jnp.arange(B, dtype=jnp.int32), Np)
    vox = jax.random.randint(ks[2], (N, 3), 0, R, dtype=jnp.int32)
    coords_int = jnp.concatenate([batch_idx[:, None], vox], axis=1)   # [N, 4]
    p_v_dist = jax.random.normal(ks[3], (N, 4), jnp.float32)

    params = init_params(ks[4], C, Cout)

    out = projection_forward(features, norm_coords, coords_int, p_v_dist,
                             proj_axis, params, R, tile_p=128, point_chunk=512)
    out = jax.block_until_ready(out)

    ref = reference(features, norm_coords, coords_int, p_v_dist, proj_axis,
                    params, R)
    assert out.shape == (B, R, R, Cout)
    assert jnp.allclose(out, ref, atol=1e-4, rtol=1e-4), "kernel/reference mismatch"
    print("KERNEL_OK")
</pallas_src>

<mosaic_0001>
module attributes {stable_mosaic.version = 11 : i64} {
  func.func @_zbase_kernel(%arg0: i32, %arg1: memref<32x9xf32, #tpu.memory_space<vmem>>, %arg2: memref<9x16xf32, #tpu.memory_space<vmem>>, %arg3: memref<1x16xf32, #tpu.memory_space<vmem>>, %arg4: memref<32x16xf32, #tpu.memory_space<vmem>>) attributes {dimension_semantics = [#tpu.dimension_semantics<parallel>], iteration_bounds = array<i64: 1>, scalar_prefetch = 0 : i64, scratch_operands = 0 : i64, tpu.core_type = #tpu.core_type<tc>, window_params = [{transform_indices = @transform_0, window_bounds = array<i64: 32, 9>}, {pipeline_mode = #tpu.pipeline_mode<synchronous>, transform_indices = @transform_1, window_bounds = array<i64: 9, 16>}, {pipeline_mode = #tpu.pipeline_mode<synchronous>, transform_indices = @transform_2, window_bounds = array<i64: 1, 16>}, {transform_indices = @transform_3, window_bounds = array<i64: 32, 16>}]} {
    %c0 = arith.constant 0 : index
    %c0_0 = arith.constant 0 : index
    %0 = vector.load %arg1[%c0, %c0_0] : memref<32x9xf32, #tpu.memory_space<vmem>>, vector<32x9xf32>
    %c0_1 = arith.constant 0 : index
    %c0_2 = arith.constant 0 : index
    %1 = vector.load %arg2[%c0_1, %c0_2] : memref<9x16xf32, #tpu.memory_space<vmem>>, vector<9x16xf32>
    %cst = arith.constant dense<0.000000e+00> : vector<32x16xf32>
    %2 = tpu.matmul %0, %1, %cst {dimension_numbers = #tpu.dot_dimension_numbers<[1], [0], [0], [1], [0, 0, 1, 1], [], []>} : vector<32x9xf32>, vector<9x16xf32>, vector<32x16xf32> -> vector<32x16xf32>
    %c0_3 = arith.constant 0 : index
    %c0_4 = arith.constant 0 : index
    %3 = vector.load %arg3[%c0_3, %c0_4] : memref<1x16xf32, #tpu.memory_space<vmem>>, vector<1x16xf32>
    %4 = vector.broadcast %3 : vector<1x16xf32> to vector<32x16xf32>
    %5 = arith.addf %2, %4 : vector<32x16xf32>
    %c0_5 = arith.constant 0 : index
    %c0_6 = arith.constant 0 : index
    %6 = vector.load %arg4[%c0_5, %c0_6] : memref<32x16xf32, #tpu.memory_space<vmem>>, vector<32x16xf32>
    tpu.vector_store %arg4[%c0_5, %c0_6], %5 {strides = array<i32>} : memref<32x16xf32, #tpu.memory_space<vmem>>, vector<32x16xf32>,
    return
  }
  func.func @transform_0(%arg0: i32) -> (i32, i32) {
    %c0_i32 = arith.constant 0 : i32
    %c0_i32_0 = arith.constant 0 : i32
    return %arg0, %c0_i32 : i32, i32
  }
  func.func @transform_1(%arg0: i32) -> (i32, i32) {
    %c0_i32 = arith.constant 0 : i32
    %c0_i32_0 = arith.constant 0 : i32
    %c0_i32_1 = arith.constant 0 : i32
    return %c0_i32, %c0_i32_0 : i32, i32
  }
  func.func @transform_2(%arg0: i32) -> (i32, i32) {
    %c0_i32 = arith.constant 0 : i32
    %c0_i32_0 = arith.constant 0 : i32
    %c0_i32_1 = arith.constant 0 : i32
    return %c0_i32, %c0_i32_0 : i32, i32
  }
  func.func @transform_3(%arg0: i32) -> (i32, i32) {
    %c0_i32 = arith.constant 0 : i32
    %c0_i32_0 = arith.constant 0 : i32
    return %arg0, %c0_i32 : i32, i32
  }
}

</mosaic_0001>

<llo_original>
// kernel: tpu_custom_call.1
$region0: #{tpu_custom_call.1}
  #allocation0 [shape = 'u32[]', space=smem, size = 0x4, offset = 0x4, fixed_abs, tag = 'smem constant byte address 0x4 - core index']
  #allocation1 [shape = 'u32[144,128]{1,0:T(1,128)}', space=vmem, size = 0x12000, scoped, tag = 'internal scratch']
  %s0 = inlined_call_operand.vmem [shape: f32[32,9], index: 0, kind: input, shape index: {}]
  %s1 = inlined_call_operand.vmem [shape: f32[9,16], index: 1, kind: input, shape index: {}]
  %s2 = inlined_call_operand.vmem [shape: f32[1,16], index: 2, kind: input, shape index: {}]
  %s3 = inlined_call_operand.vmem [shape: f32[32,16], index: 3, kind: output, shape index: {}]
  %s4 = sld [smem:[#allocation0]]
  $region22: #{tpu_custom_call.1} parent=0
    _
  %s6 = ssub.s32 1, %s4
  %s7 = scalar_select 0, %s6, %s4
  // Predicated region
  $region2: #{tpu_custom_call.1} parent=0 // pred_check
    _
  $region3: #{tpu_custom_call.1} parent=0 // pred_check_branch
    %9 = sbr.rel (0) target = $region5
  $region4: #{tpu_custom_call.1} parent=0 // pred_region
    _
  $region5: #{tpu_custom_call.1} parent=0 // pred_fallthru
    _
  // Predicated region
  $region6: #{tpu_custom_call.1} parent=0 // pred_check
    _
  $region7: #{tpu_custom_call.1} parent=0 // pred_check_branch
    %11 = sbr.rel (0) target = $region9
  $region8: #{tpu_custom_call.1} parent=0 // pred_region
    _
  $region9: #{tpu_custom_call.1} parent=0 // pred_fallthru
    _
  // Predicated region
  $region10: #{tpu_custom_call.1} parent=0 // pred_check
    _
  $region11: #{tpu_custom_call.1} parent=0 // pred_check_branch
    %13 = sbr.rel (0) target = $region13
  $region12: #{tpu_custom_call.1} parent=0 // pred_region
    _
  $region13: #{tpu_custom_call.1} parent=0 // pred_fallthru
    _
  %v14 = vld [vmem:[%s0] sm:$0xff]
  %v15 = vld [vmem:[%s0 + $0x8] sm:$0xff]
  %v16 = vld [vmem:[%s0 + $0x10] sm:$0xff]
  %v17 = vld [vmem:[%s0 + $0x18] sm:$0xff]
  %v18 = vld [vmem:[%s1] sm:$0xff]
  %v19 = vld [vmem:[%s1 + $0x8] sm:$0x1]
  %v20 = vld [vmem:[%s2] sm:$0x1]
  %v22 = vlaneseq
  %v23 = vshrl.u32 %v22, 7
  %v24 = vsub.s32 0, %v23
  %v25 = vrot.slane %v20, %v24
  %vm27 = vcmask 72704
  %v29 = vsel %vm27, %v14, 0
  %v32 = vsel %vm27, %v15, 0
  %v35 = vsel %vm27, %v16, 0
  %v38 = vsel %vm27, %v17, 0
  %vm40 = vcmask 1040384
  %v42 = vsel %vm40, %v19, 0
  %44 = vmatprep.subr.mxu0 0.0
  %45 = vmatpush1.msra.mxu0 %v18
  %46 = vmatprep.subr.mxu0 0.0
  %47 = vmatpush1.msra.mxu0 %v42
  %48 = vmatprep.subr.mxu0 0.0
  %49 = vmatpush1.msra.mxu0 0.0
  %50 = vmatprep.subr.mxu0 0.0
  %51 = vmatpush1.msra.mxu0 0.0
  %52 = vmatprep.subr.mxu0 0.0
  %53 = vmatpush1.msra.mxu0 0.0
  %54 = vmatprep.subr.mxu0 0.0
  %55 = vmatpush1.msra.mxu0 0.0
  %56 = vmatprep.subr.mxu0 0.0
  %57 = vmatpush1.msra.mxu0 0.0
  %58 = vmatprep.subr.mxu0 0.0
  %59 = vmatpush1.msra.mxu0 0.0
  %60 = vmatprep.subr.mxu0 0.0
  %61 = vmatpush1.msra.mxu0 0.0
  %62 = vmatprep.subr.mxu0 0.0
  %63 = vmatpush1.msra.mxu0 0.0
  %64 = vmatprep.subr.mxu0 0.0
  %65 = vmatpush1.msra.mxu0 0.0
  %66 = vmatprep.subr.mxu0 0.0
  %67 = vmatpush1.msra.mxu0 0.0
  %68 = vmatprep.subr.mxu0 0.0
  %69 = vmatpush1.msra.mxu0 0.0
  %70 = vmatprep.subr.mxu0 0.0
  %71 = vmatpush1.msra.mxu0 0.0
  %72 = vmatprep.subr.mxu0 0.0
  %73 = vmatpush1.msra.mxu0 0.0
  %74 = vmatprep.subr.mxu0 0.0
  %75 = vmatpush1.msra.mxu0 0.0
  %76 = vmatprep.subr.mxu0 0.0
  %77 = vmatpush1.msra.mxu0 0.0
  %78 = vmatprep.subr.mxu0 0.0
  %79 = vmatpush1.msra.mxu0 0.0
  %80 = vmatprep.subr.mxu0 0.0
  %81 = vmatpush1.msra.mxu0 0.0
  %82 = vmatprep.subr.mxu0 0.0
  %83 = vmatpush1.msra.mxu0 0.0
  %84 = vmatprep.subr.mxu0 0.0
  %85 = vmatpush1.msra.mxu0 0.0
  %86 = vmatprep.subr.mxu0 0.0
  %87 = vmatpush1.msra.mxu0 0.0
  %88 = vmatprep.subr.mxu0 0.0
  %89 = vmatpush1.msra.mxu0 0.0
  %90 = vmatprep.subr.mxu0 0.0
  %91 = vmatpush1.msra.mxu0 0.0
  %92 = vmatprep.subr.mxu0 0.0
  %93 = vmatpush1.msra.mxu0 0.0
  %94 = vmatprep.subr.mxu0 0.0
  %95 = vmatpush1.msra.mxu0 0.0
  %96 = vmatprep.subr.mxu0 0.0
  %97 = vmatpush1.msra.mxu0 0.0
  %98 = vmatprep.subr.mxu0 0.0
  %99 = vmatpush1.msra.mxu0 0.0
  %100 = vmatprep.subr.mxu0 0.0
  %101 = vmatpush1.msra.mxu0 0.0
  %102 = vmatprep.subr.mxu0 0.0
  %103 = vmatpush1.msra.mxu0 0.0
  %104 = vmatprep.subr.mxu0 0.0
  %105 = vmatpush1.msra.mxu0 0.0
  %106 = vmatprep.subr.mxu0 0.0
  %107 = vmatpush1.msra.mxu0 0.0
  %108 = vmatprep.mubr.f32.mxu0 0.0
  %109 = vmatmul.mubr.f32.gmra.mrb[0].mxu0 %v29
  %v110 = vpop.f32.mrb[0].mxu0
  %v111 = vadd.f32 %v25, %v110
  %v112 = vpop.f32.mrb[0].mxu0
  %113 = vmatprep.mubr.f32.mxu0 0.0
  %114 = vmatmul.mubr.f32.gmra.mrb[0].mxu0 %v32
  %v115 = vpop.f32.mrb[0].mxu0
  %v116 = vadd.f32 %v25, %v115
  %v117 = vpop.f32.mrb[0].mxu0
  %118 = vmatprep.mubr.f32.mxu0 0.0
  %119 = vmatmul.mubr.f32.gmra.mrb[0].mxu0 %v35
  %v120 = vpop.f32.mrb[0].mxu0
  %v121 = vadd.f32 %v25, %v120
  %v122 = vpop.f32.mrb[0].mxu0
  %123 = vmatprep.mubr.f32.mxu0 0.0
  %124 = vmatmul.mubr.f32.gmra.mrb[0].mxu0 %v38
  %v125 = vpop.f32.mrb[0].mxu0
  %v126 = vadd.f32 %v25, %v125
  %v127 = vpop.f32.mrb[0].mxu0
  %128 = vdwg.mxu0
  %vm129 = vcmask 130048
  %130 = vst.msk [vmem:[%s3] sm:$0xff] %vm129, %v111
  %131 = vst.msk [vmem:[%s3 + $0x8] sm:$0xff] %vm129, %v116
  %132 = vst.msk [vmem:[%s3 + $0x10] sm:$0xff] %vm129, %v121
  %133 = vst.msk [vmem:[%s3 + $0x18] sm:$0xff] %vm129, %v126
  // Predicated region
  $region14: #{tpu_custom_call.1} parent=0 // pred_check
    _
  $region15: #{tpu_custom_call.1} parent=0 // pred_check_branch
    %135 = sbr.rel (0) target = $region17
  $region16: #{tpu_custom_call.1} parent=0 // pred_region
    _
  $region17: #{tpu_custom_call.1} parent=0 // pred_fallthru
    _
  // Predicated region
  $region18: #{tpu_custom_call.1} parent=0 // pred_check
    _
  $region19: #{tpu_custom_call.1} parent=0 // pred_check_branch
    %137 = sbr.rel (0) target = $region21
  $region20: #{tpu_custom_call.1} parent=0 // pred_region
    _
  $region21: #{tpu_custom_call.1} parent=0 // pred_fallthru
    _

</llo_original>
